<compile_context>
chip_gen: v5e
topology: v5e:2x2
jax: 0.10.0
libtpu: 0.0.40
codegen_flags: <defaults>
</compile_context>

<pallas_src>
import numpy as np

import jax
import jax.numpy as jnp
from jax.experimental import pallas as pl
from jax.experimental.pallas import tpu as pltpu


def _make_tablock_kernel(C, N, TB, compute_dtype):
    def kernel(x_ref, xr_ref, w_ref, b_ref, o_ref):
        # x_ref : (TB, C, N)  input block (f32; cast in-kernel for bf16 compute)
        # xr_ref: (TB, N, C)  residual, already in post-transpose/reshape layout (f32)
        # w_ref : (3, N, N)   stacked [Wq*norm_fact, Wk, Wv], (in, out) layout
        # b_ref : (3, 1, N)   stacked biases [bq*norm_fact, bk, bv], f32
        # o_ref : (TB, N, C)  output block (pre-reshape layout)

        # Leading-dim merge only (free when C % 8 == 0, e.g. MANIQA C=768).
        x2 = x_ref[...].reshape(TB * C, N).astype(compute_dtype)   # (TB*C, N)

        def proj(i):
            y = jnp.dot(x2, w_ref[i], preferred_element_type=jnp.float32)
            y = y + b_ref[i]                                       # (1, N) broadcast, f32
            return y.reshape(TB, C, N)

        q = proj(0)    # norm_fact already folded into Wq/bq
        k = proj(1)
        v = proj(2)

        # scores: s[b, i, j] = sum_n q[b, i, n] * k[b, j, n]  (no explicit k^T)
        s = jax.lax.dot_general(
            q.astype(compute_dtype), k.astype(compute_dtype),
            (((2,), (2,)), ((0,), (0,))),
            preferred_element_type=jnp.float32)                    # (TB, C, C) f32

        # softmax in f32; normalization via approximate reciprocal (EUP slot).
        s = s - jnp.max(s, axis=-1, keepdims=True)
        p = jnp.exp(s)
        p = p * pl.reciprocal(jnp.sum(p, axis=-1, keepdims=True), approx=True)

        # (attn @ v)^T computed directly on the MXU (no XLU transpose):
        #   av_t[b, n, j] = sum_i v[b, i, n] * p[b, j, i]
        av_t = jax.lax.dot_general(
            v.astype(compute_dtype), p.astype(compute_dtype),
            (((1,), (2,)), ((0,), (0,))),
            preferred_element_type=jnp.float32)                    # (TB, N, C) f32

        # Fused PyTorch transpose/reshape quirk + residual add.
        o_ref[...] = (av_t + xr_ref[...]).astype(o_ref.dtype)

    return kernel


def tablock_pallas(x, wq, bq, wk, bk, wv, bv, *,
                   matmul_dtype=jnp.float32, block_b=None):
    """x: (B, C, N) float32. Weights (N, N) in PyTorch (out, in) convention, biases (N,)."""
    B, C, N = x.shape
    norm_fact = float(N) ** (-0.5)
    compute_dtype = np.dtype(matmul_dtype)

    # Stack weights as (3, N, N) in (in, out) layout; fold norm_fact into q.
    # NOTE: in a real model this prep (and the bf16 cast) would be hoisted out
    # of the per-forward hot path and done once per checkpoint load.
    w3 = jnp.stack([wq.T * norm_fact, wk.T, wv.T], axis=0).astype(compute_dtype)  # (3, N, N)
    b3 = jnp.stack([bq * norm_fact, bk, bv], axis=0)[:, None, :].astype(jnp.float32)  # (3, 1, N)

    # Batch tile: amortize per-grid-step overhead (~512 projection rows target)
    # but keep >= 2 grid steps so the "parallel" axis shards across TensorCores.
    if block_b is None:
        target_rows = 512
        tb = max(1, min(B // 2 if B >= 2 else B, -(-target_rows // C)))
        while tb > 1 and B % tb != 0:
            tb -= 1
    else:
        tb = block_b
    assert B % tb == 0
    grid = (B // tb,)

    # Residual view in the post-transpose/reshape layout (metadata-only reshape).
    xr = x.reshape(B, N, C)

    itemsize = compute_dtype.itemsize
    f32 = 4
    cost = pl.CostEstimate(
        flops=2 * B * C * N * (3 * N + 2 * C),
        transcendentals=B * C * (C + 1),
        bytes_accessed=(2 * B * C * N * f32)            # x (projection + residual views)
        + (3 * N * N * itemsize) + (3 * N * f32)        # stacked weights + biases
        + (B * C * N * f32),                            # output
    )

    io_bytes = (tb * C * N * f32            # x block
                + 2 * tb * N * C * f32      # residual block + output block
                + 3 * N * N * itemsize      # weights
                + 3 * N * f32)              # biases
    inter_bytes = (3 * tb * C * N * f32     # q, k, v (f32)
                   + 2 * tb * C * C * f32   # scores + probs (f32)
                   + tb * N * C * f32       # av_t (f32)
                   + 5 * tb * C * N * itemsize)  # compute-dtype copies (x2, q, k, v, p)
    vmem_limit = int(min(48 << 20, max(32 << 20, 2 * io_bytes + inter_bytes + (4 << 20))))

    out = pl.pallas_call(
        _make_tablock_kernel(C, N, tb, compute_dtype),
        out_shape=jax.ShapeDtypeStruct((B, N, C), x.dtype),
        grid_spec=pltpu.PrefetchScalarGridSpec(
            num_scalar_prefetch=0,
            grid=grid,
            in_specs=[
                pl.BlockSpec((tb, C, N), lambda g: (g, 0, 0)),     # x (projection)
                pl.BlockSpec((tb, N, C), lambda g: (g, 0, 0)),     # x residual view
                pl.BlockSpec((3, N, N), lambda g: (0, 0, 0)),      # stacked W (grid-invariant)
                pl.BlockSpec((3, 1, N), lambda g: (0, 0, 0)),      # stacked bias
            ],
            out_specs=pl.BlockSpec((tb, N, C), lambda g: (g, 0, 0)),
        ),
        compiler_params=pltpu.CompilerParams(
            dimension_semantics=("parallel",),
            vmem_limit_bytes=vmem_limit,
        ),
        cost_estimate=cost,
    )(x, xr, w3, b3)

    # (B, N, C) contiguous -> (B, C, N) is metadata-only and reproduces PyTorch's
    # (attn @ v).transpose(1, 2).reshape(B, C, N); the residual is already fused.
    # TODO(synk): proj_drop (nn.Dropout p=0.1) is identity in eval mode; training-mode dropout not implemented.
    return out.reshape(B, C, N)


def tablock_ref(x, wq, bq, wk, bk, wv, bv):
    """Pure-JAX reference mirroring the PyTorch forward (eval mode)."""
    B, C, N = x.shape
    norm_fact = float(N) ** (-0.5)
    q = x @ wq.T + bq
    k = x @ wk.T + bk
    v = x @ wv.T + bv
    attn = jnp.einsum("bcn,bdn->bcd", q, k) * norm_fact
    attn = jax.nn.softmax(attn, axis=-1)
    out = jnp.einsum("bcd,bdn->bcn", attn, v)
    out = jnp.transpose(out, (0, 2, 1)).reshape(B, C, N)
    return out + x


if __name__ == "__main__":
    B, C, N = 2, 16, 32  # dim == N (nn.Linear acts on the last axis)

    key = jax.random.PRNGKey(0)
    kx, kq, kbq, kk, kbk, kv, kbv = jax.random.split(key, 7)

    x = jax.random.normal(kx, (B, C, N), dtype=jnp.float32)
    wq = jax.random.normal(kq, (N, N), dtype=jnp.float32) * 0.05
    bq = jax.random.normal(kbq, (N,), dtype=jnp.float32) * 0.05
    wk = jax.random.normal(kk, (N, N), dtype=jnp.float32) * 0.05
    bk = jax.random.normal(kbk, (N,), dtype=jnp.float32) * 0.05
    wv = jax.random.normal(kv, (N, N), dtype=jnp.float32) * 0.05
    bv = jax.random.normal(kbv, (N,), dtype=jnp.float32) * 0.05

    ref = tablock_ref(x, wq, bq, wk, bk, wv, bv)

    # f32 matmul path (default; works on all generations / interpret mode).
    # bf16 matmul operands (matmul_dtype=jnp.bfloat16) remain an opt-in for
    # v6e/v7x hardware runs and are intentionally not exercised here.
    out = jax.block_until_ready(tablock_pallas(x, wq, bq, wk, bk, wv, bv))
    assert out.shape == (B, C, N)
    assert jnp.allclose(out, ref, atol=2e-3, rtol=2e-3), "mismatch vs reference"

    print("KERNEL_OK")
</pallas_src>

<mosaic_0001>
module attributes {stable_mosaic.version = 11 : i64} {
  func.func @kernel(%arg0: i32, %arg1: memref<1x16x32xf32, #tpu.memory_space<vmem>>, %arg2: memref<1x32x16xf32, #tpu.memory_space<vmem>>, %arg3: memref<3x32x32xf32, #tpu.memory_space<vmem>>, %arg4: memref<3x1x32xf32, #tpu.memory_space<vmem>>, %arg5: memref<1x32x16xf32, #tpu.memory_space<vmem>>) attributes {dimension_semantics = [#tpu.dimension_semantics<parallel>], iteration_bounds = array<i64: 2>, scalar_prefetch = 0 : i64, scratch_operands = 0 : i64, tpu.core_type = #tpu.core_type<tc>, window_params = [{transform_indices = @transform_0, window_bounds = array<i64: 1, 16, 32>}, {transform_indices = @transform_1, window_bounds = array<i64: 1, 32, 16>}, {pipeline_mode = #tpu.pipeline_mode<synchronous>, transform_indices = @transform_2, window_bounds = array<i64: 3, 32, 32>}, {pipeline_mode = #tpu.pipeline_mode<synchronous>, transform_indices = @transform_3, window_bounds = array<i64: 3, 1, 32>}, {transform_indices = @transform_4, window_bounds = array<i64: 1, 32, 16>}]} {
    %c0 = arith.constant 0 : index
    %c0_0 = arith.constant 0 : index
    %c0_1 = arith.constant 0 : index
    %0 = vector.load %arg1[%c0, %c0_0, %c0_1] : memref<1x16x32xf32, #tpu.memory_space<vmem>>, vector<1x16x32xf32>
    %1 = vector.shape_cast %0 : vector<1x16x32xf32> to vector<16x32xf32>
    %c0_2 = arith.constant 0 : index
    %c0_3 = arith.constant 0 : index
    %c0_4 = arith.constant 0 : index
    %2 = vector.load %arg3[%c0_2, %c0_3, %c0_4] : memref<3x32x32xf32, #tpu.memory_space<vmem>>, vector<1x32x32xf32>
    %3 = vector.shape_cast %2 : vector<1x32x32xf32> to vector<32x32xf32>
    %cst = arith.constant dense<0.000000e+00> : vector<16x32xf32>
    %4 = tpu.matmul %1, %3, %cst {dimension_numbers = #tpu.dot_dimension_numbers<[1], [0], [0], [1], [0, 0, 1, 1], [], []>} : vector<16x32xf32>, vector<32x32xf32>, vector<16x32xf32> -> vector<16x32xf32>
    %c0_5 = arith.constant 0 : index
    %c0_6 = arith.constant 0 : index
    %c0_7 = arith.constant 0 : index
    %5 = vector.load %arg4[%c0_5, %c0_6, %c0_7] : memref<3x1x32xf32, #tpu.memory_space<vmem>>, vector<1x1x32xf32>
    %6 = vector.shape_cast %5 : vector<1x1x32xf32> to vector<1x32xf32>
    %7 = vector.broadcast %6 : vector<1x32xf32> to vector<16x32xf32>
    %8 = arith.addf %4, %7 : vector<16x32xf32>
    %9 = vector.shape_cast %8 : vector<16x32xf32> to vector<1x16x32xf32>
    %c1 = arith.constant 1 : index
    %c0_8 = arith.constant 0 : index
    %c0_9 = arith.constant 0 : index
    %10 = vector.load %arg3[%c1, %c0_8, %c0_9] : memref<3x32x32xf32, #tpu.memory_space<vmem>>, vector<1x32x32xf32>
    %11 = vector.shape_cast %10 : vector<1x32x32xf32> to vector<32x32xf32>
    %cst_10 = arith.constant dense<0.000000e+00> : vector<16x32xf32>
    %12 = tpu.matmul %1, %11, %cst_10 {dimension_numbers = #tpu.dot_dimension_numbers<[1], [0], [0], [1], [0, 0, 1, 1], [], []>} : vector<16x32xf32>, vector<32x32xf32>, vector<16x32xf32> -> vector<16x32xf32>
    %c1_11 = arith.constant 1 : index
    %c0_12 = arith.constant 0 : index
    %c0_13 = arith.constant 0 : index
    %13 = vector.load %arg4[%c1_11, %c0_12, %c0_13] : memref<3x1x32xf32, #tpu.memory_space<vmem>>, vector<1x1x32xf32>
    %14 = vector.shape_cast %13 : vector<1x1x32xf32> to vector<1x32xf32>
    %15 = vector.broadcast %14 : vector<1x32xf32> to vector<16x32xf32>
    %16 = arith.addf %12, %15 : vector<16x32xf32>
    %17 = vector.shape_cast %16 : vector<16x32xf32> to vector<1x16x32xf32>
    %c2 = arith.constant 2 : index
    %c0_14 = arith.constant 0 : index
    %c0_15 = arith.constant 0 : index
    %18 = vector.load %arg3[%c2, %c0_14, %c0_15] : memref<3x32x32xf32, #tpu.memory_space<vmem>>, vector<1x32x32xf32>
    %19 = vector.shape_cast %18 : vector<1x32x32xf32> to vector<32x32xf32>
    %cst_16 = arith.constant dense<0.000000e+00> : vector<16x32xf32>
    %20 = tpu.matmul %1, %19, %cst_16 {dimension_numbers = #tpu.dot_dimension_numbers<[1], [0], [0], [1], [0, 0, 1, 1], [], []>} : vector<16x32xf32>, vector<32x32xf32>, vector<16x32xf32> -> vector<16x32xf32>
    %c2_17 = arith.constant 2 : index
    %c0_18 = arith.constant 0 : index
    %c0_19 = arith.constant 0 : index
    %21 = vector.load %arg4[%c2_17, %c0_18, %c0_19] : memref<3x1x32xf32, #tpu.memory_space<vmem>>, vector<1x1x32xf32>
    %22 = vector.shape_cast %21 : vector<1x1x32xf32> to vector<1x32xf32>
    %23 = vector.broadcast %22 : vector<1x32xf32> to vector<16x32xf32>
    %24 = arith.addf %20, %23 : vector<16x32xf32>
    %25 = vector.shape_cast %24 : vector<16x32xf32> to vector<1x16x32xf32>
    %cst_20 = arith.constant dense<0.000000e+00> : vector<1x16x16xf32>
    %26 = tpu.matmul %9, %17, %cst_20 {dimension_numbers = #tpu.dot_dimension_numbers<[2], [2], [1], [1], [0, 0, 0, 1, 1, 1], [0], [0]>} : vector<1x16x32xf32>, vector<1x16x32xf32>, vector<1x16x16xf32> -> vector<1x16x16xf32>
    %cst_21 = arith.constant dense<0xFF800000> : vector<1x16xf32>
    %27 = vector.multi_reduction <maximumf>, %26, %cst_21 [2] : vector<1x16x16xf32> to vector<1x16xf32>
    %28 = vector.shape_cast %27 : vector<1x16xf32> to vector<1x16x1xf32>
    %29 = vector.broadcast %28 : vector<1x16x1xf32> to vector<1x16x16xf32>
    %30 = arith.subf %26, %29 : vector<1x16x16xf32>
    %31 = math.exp %30 : vector<1x16x16xf32>
    %cst_22 = arith.constant dense<0.000000e+00> : vector<1x16xf32>
    %32 = vector.multi_reduction <add>, %31, %cst_22 [2] : vector<1x16x16xf32> to vector<1x16xf32>
    %33 = vector.shape_cast %32 : vector<1x16xf32> to vector<1x16x1xf32>
    %34 = tpu.reciprocal %33 {approx = true} : vector<1x16x1xf32> -> vector<1x16x1xf32>
    %35 = vector.broadcast %34 : vector<1x16x1xf32> to vector<1x16x16xf32>
    %36 = arith.mulf %31, %35 : vector<1x16x16xf32>
    %cst_23 = arith.constant dense<0.000000e+00> : vector<1x32x16xf32>
    %37 = tpu.matmul %25, %36, %cst_23 {dimension_numbers = #tpu.dot_dimension_numbers<[1], [2], [2], [1], [0, 0, 0, 2, 1, 1], [0], [0]>} : vector<1x16x32xf32>, vector<1x16x16xf32>, vector<1x32x16xf32> -> vector<1x32x16xf32>
    %c0_24 = arith.constant 0 : index
    %c0_25 = arith.constant 0 : index
    %c0_26 = arith.constant 0 : index
    %38 = vector.load %arg2[%c0_24, %c0_25, %c0_26] : memref<1x32x16xf32, #tpu.memory_space<vmem>>, vector<1x32x16xf32>
    %39 = arith.addf %37, %38 : vector<1x32x16xf32>
    %c0_27 = arith.constant 0 : index
    %c0_28 = arith.constant 0 : index
    %c0_29 = arith.constant 0 : index
    %40 = vector.load %arg5[%c0_27, %c0_28, %c0_29] : memref<1x32x16xf32, #tpu.memory_space<vmem>>, vector<1x32x16xf32>
    tpu.vector_store %arg5[%c0_27, %c0_28, %c0_29], %39 {strides = array<i32>} : memref<1x32x16xf32, #tpu.memory_space<vmem>>, vector<1x32x16xf32>,
    return
  }
  func.func @transform_0(%arg0: i32) -> (i32, i32, i32) {
    %c0_i32 = arith.constant 0 : i32
    %c0_i32_0 = arith.constant 0 : i32
    %c0_i32_1 = arith.constant 0 : i32
    return %arg0, %c0_i32, %c0_i32_0 : i32, i32, i32
  }
  func.func @transform_1(%arg0: i32) -> (i32, i32, i32) {
    %c0_i32 = arith.constant 0 : i32
    %c0_i32_0 = arith.constant 0 : i32
    %c0_i32_1 = arith.constant 0 : i32
    return %arg0, %c0_i32, %c0_i32_0 : i32, i32, i32
  }
  func.func @transform_2(%arg0: i32) -> (i32, i32, i32) {
    %c0_i32 = arith.constant 0 : i32
    %c0_i32_0 = arith.constant 0 : i32
    %c0_i32_1 = arith.constant 0 : i32
    %c0_i32_2 = arith.constant 0 : i32
    return %c0_i32, %c0_i32_0, %c0_i32_1 : i32, i32, i32
  }
  func.func @transform_3(%arg0: i32) -> (i32, i32, i32) {
    %c0_i32 = arith.constant 0 : i32
    %c0_i32_0 = arith.constant 0 : i32
    %c0_i32_1 = arith.constant 0 : i32
    %c0_i32_2 = arith.constant 0 : i32
    return %c0_i32, %c0_i32_0, %c0_i32_1 : i32, i32, i32
  }
  func.func @transform_4(%arg0: i32) -> (i32, i32, i32) {
    %c0_i32 = arith.constant 0 : i32
    %c0_i32_0 = arith.constant 0 : i32
    %c0_i32_1 = arith.constant 0 : i32
    return %arg0, %c0_i32, %c0_i32_0 : i32, i32, i32
  }
}

</mosaic_0001>

<llo_original>
// kernel: tpu_custom_call.1
$region0: #{tpu_custom_call.1}
  #allocation0 [shape = 'u32[]', space=smem, size = 0x4, offset = 0x4, fixed_abs, tag = 'smem constant byte address 0x4 - core index']
  #allocation1 [shape = 'u32[72,128]{1,0:T(1,128)}', space=vmem, size = 0x9000, scoped, tag = 'internal scratch']
  %s0 = inlined_call_operand.hbm [shape: f32[2,16,32], index: 0, kind: input, shape index: {}]
  %s1 = inlined_call_operand.vmem [shape: f32[2,32,16], index: 1, kind: input, shape index: {}]
  %s2 = inlined_call_operand.vmem [shape: f32[3,32,32], index: 2, kind: input, shape index: {}]
  %s3 = inlined_call_operand.hbm [shape: f32[3,1,32], index: 3, kind: input, shape index: {}]
  %s4 = inlined_call_operand.vmem [shape: f32[2,32,16], index: 4, kind: output, shape index: {}]
  %s5 = sld [smem:[#allocation0]]
  $region57: #{tpu_custom_call.1} parent=0
    _
  %s7 = ssub.s32 1, %s5
  %s8 = scalar_select 0, %s7, %s5
  $region1: #{tpu_custom_call.1} parent=0
    #allocation2 [shape = 'u8[16384]{0}', space=vmem, size = 0x4000, scoped, tag = 'input window, operand 0']
    #allocation3 [shape = 's32[2]{0}', space=sflag, size = 0x8, scoped, tag = 'scoped memory for tpu_custom_call.1']
    #allocation4 [shape = 'u8[1536]{0}', space=vmem, size = 0x800, scoped, tag = 'input window, operand 3, single buffered']
    #allocation5 [shape = 's32[1]{0}', space=sflag, size = 0x4, scoped, tag = 'scoped memory for tpu_custom_call.1']
    %9 = vsyncpa [#allocation3], 0
    %s10 = scalar_lea.sflag [#allocation3], 1
    %11 = vsyncpa %s10, 0
    %12 = vsyncpa [#allocation5], 0
    loop: start=0, step=1, limit=4
    $region2: #{tpu_custom_call.1} parent=1 // loop_pre_header
      _
    $region3: #{tpu_custom_call.1} parent=1 // loop_header
      %s14 = sphi 0, %s18
      %p15 = scmp.ge.s32.totalorder %s14, 4
      %s24 = sphi 0, %s26
      %s27 = sphi 0, %s24
      %s28 = sphi 0, %s27
      %s44 = sphi 0, %s28
      %s50 = sphi 0, %s52
      %s53 = sphi 0, %s50
      %s54 = sphi 0, %s53
      %s70 = sphi 0, %s54
      %s74 = sphi 0, %s74
      %s76 = sphi 0, %s74
      %s77 = sphi 0, %s76
      %s91 = sphi 0, %s77
      %s95 = sphi 0, %s95
      %s97 = sphi 0, %s95
      %s98 = sphi 0, %s97
      %s112 = sphi 0, %s98
      %s118 = sphi 0, %s120
      %s121 = sphi 0, %s118
      %s122 = sphi 0, %s121
      %s138 = sphi 0, %s122
    $region4: #{tpu_custom_call.1} parent=1 // loop_header_branch
      %17 = sbr.rel (%p15) target = $region8
    $region5: #{tpu_custom_call.1} parent=1 // loop_body
      %s19 = ssub.s32 %s14, 1
      %s20 = ssub.s32 %s14, 2
      %s21 = sadd.s32 %s14, 1
      %s22 = ssub.s32 %s14, %s21
      %p23 = scmp.eq.s32.totalorder %s22, 0
      %s25 = sadd.s32 %s24, 1
      %s26 = scalar_select %p23, %s24, %s25
      %p29 = pneg %p23
      %p30 = scmp.eq.s32.totalorder %s14, 1
      %p31 = por %p29, %p30
      %p32 = scmp.ne.s32.totalorder %s24, %s27
      %p33 = scmp.eq.s32.totalorder %s14, 0
      %p34 = por %p32, %p33
      %p35 = scmp.ne.s32.totalorder %s24, %s27
      %p36 = scmp.eq.s32.totalorder %s19, 1
      %p37 = por %p35, %p36
      %p38 = scmp.ne.s32.totalorder %s27, %s28
      %p39 = scmp.eq.s32.totalorder %s19, 0
      %p40 = por %p38, %p39
      %p41 = scmp.ne.s32.totalorder %s27, %s28
      %p42 = scmp.eq.s32.totalorder %s20, 1
      %p43 = por %p41, %p42
      %p45 = scmp.ne.s32.totalorder %s28, %s44
      %p46 = scmp.eq.s32.totalorder %s20, 0
      %p47 = por %p45, %p46
      %s48 = ssub.s32 %s14, %s21
      %p49 = scmp.eq.s32.totalorder %s48, 0
      %s51 = sadd.s32 %s50, 1
      %s52 = scalar_select %p49, %s50, %s51
      %p55 = pneg %p49
      %p56 = scmp.eq.s32.totalorder %s14, 1
      %p57 = por %p55, %p56
      %p58 = scmp.ne.s32.totalorder %s50, %s53
      %p59 = scmp.eq.s32.totalorder %s14, 0
      %p60 = por %p58, %p59
      %p61 = scmp.ne.s32.totalorder %s50, %s53
      %p62 = scmp.eq.s32.totalorder %s19, 1
      %p63 = por %p61, %p62
      %p64 = scmp.ne.s32.totalorder %s53, %s54
      %p65 = scmp.eq.s32.totalorder %s19, 0
      %p66 = por %p64, %p65
      %p67 = scmp.ne.s32.totalorder %s53, %s54
      %p68 = scmp.eq.s32.totalorder %s20, 1
      %p69 = por %p67, %p68
      %p71 = scmp.ne.s32.totalorder %s54, %s70
      %p72 = scmp.eq.s32.totalorder %s20, 0
      %p73 = por %p71, %p72
      %s75 = sadd.s32 %s74, 1
      %p78 = scmp.eq.s32.totalorder %s14, 1
      %p79 = scmp.ne.s32.totalorder %s74, %s76
      %p80 = scmp.eq.s32.totalorder %s14, 0
      %p81 = por %p79, %p80
      %p82 = scmp.ne.s32.totalorder %s74, %s76
      %p83 = scmp.eq.s32.totalorder %s19, 1
      %p84 = por %p82, %p83
      %p85 = scmp.ne.s32.totalorder %s76, %s77
      %p86 = scmp.eq.s32.totalorder %s19, 0
      %p87 = por %p85, %p86
      %p88 = scmp.ne.s32.totalorder %s76, %s77
      %p89 = scmp.eq.s32.totalorder %s20, 1
      %p90 = por %p88, %p89
      %p92 = scmp.ne.s32.totalorder %s77, %s91
      %p93 = scmp.eq.s32.totalorder %s20, 0
      %p94 = por %p92, %p93
      %s96 = sadd.s32 %s95, 1
      %p99 = scmp.eq.s32.totalorder %s14, 1
      %p100 = scmp.ne.s32.totalorder %s95, %s97
      %p101 = scmp.eq.s32.totalorder %s14, 0
      %p102 = por %p100, %p101
      %p103 = scmp.ne.s32.totalorder %s95, %s97
      %p104 = scmp.eq.s32.totalorder %s19, 1
      %p105 = por %p103, %p104
      %p106 = scmp.ne.s32.totalorder %s97, %s98
      %p107 = scmp.eq.s32.totalorder %s19, 0
      %p108 = por %p106, %p107
      %p109 = scmp.ne.s32.totalorder %s97, %s98
      %p110 = scmp.eq.s32.totalorder %s20, 1
      %p111 = por %p109, %p110
      %p113 = scmp.ne.s32.totalorder %s98, %s112
      %p114 = scmp.eq.s32.totalorder %s20, 0
      %p115 = por %p113, %p114
      %s116 = ssub.s32 %s14, %s21
      %p117 = scmp.eq.s32.totalorder %s116, 0
      %s119 = sadd.s32 %s118, 1
      %s120 = scalar_select %p117, %s118, %s119
      %p123 = pneg %p117
      %p124 = scmp.eq.s32.totalorder %s14, 1
      %p125 = por %p123, %p124
      %p126 = scmp.ne.s32.totalorder %s118, %s121
      %p127 = scmp.eq.s32.totalorder %s14, 0
      %p128 = por %p126, %p127
      %p129 = scmp.ne.s32.totalorder %s118, %s121
      %p130 = scmp.eq.s32.totalorder %s19, 1
      %p131 = por %p129, %p130
      %p132 = scmp.ne.s32.totalorder %s121, %s122
      %p133 = scmp.eq.s32.totalorder %s19, 0
      %p134 = por %p132, %p133
      %p135 = scmp.ne.s32.totalorder %s121, %s122
      %p136 = scmp.eq.s32.totalorder %s20, 1
      %p137 = por %p135, %p136
      %p139 = scmp.ne.s32.totalorder %s122, %s138
      %p140 = scmp.eq.s32.totalorder %s20, 0
      %p141 = por %p139, %p140
      %p142 = scmp.le.s32.totalorder 1, %s14
      %p143 = scmp.lt.s32.totalorder %s14, 3
      %p144 = pnand %p142, %p143
      %p145 = pneg %p144
      // Predicated region
      $region9: #{tpu_custom_call.1} parent=5 // pred_check
        _
      $region10: #{tpu_custom_call.1} parent=5 // pred_check_branch
        %147 = sbr.rel (%p144) target = $region12
      $region11: #{tpu_custom_call.1} parent=5 // pred_region
        %s148 = ssub.s32 %s14, 1
        // Predicated region
        $region13: #{tpu_custom_call.1} parent=11 // pred_check
          %p149 = pneg %p87
        $region14: #{tpu_custom_call.1} parent=11 // pred_check_branch
          %151 = sbr.rel (%p149) target = $region16
        $region15: #{tpu_custom_call.1} parent=11 // pred_region
          _
        $region16: #{tpu_custom_call.1} parent=11 // pred_fallthru
          _
        // Predicated region
        $region17: #{tpu_custom_call.1} parent=11 // pred_check
          %p152 = pneg %p108
        $region18: #{tpu_custom_call.1} parent=11 // pred_check_branch
          %154 = sbr.rel (%p152) target = $region20
        $region19: #{tpu_custom_call.1} parent=11 // pred_region
          %156 = vsyncadd [#allocation5], 0
          %s157 = sshll.u32 %s3, 4
          %s158 = int_to_ptr.hbm [resolvable:$true] %s157
          %s159 = sshll.u32 [#allocation4], 4
          %s160 = int_to_ptr.vmem [resolvable:$true] %s159
          %165 = dma.hbm_to_vmem [thread:$0]  %s158, 48, %s160, [#allocation5], 16, 16, 1
        $region20: #{tpu_custom_call.1} parent=11 // pred_fallthru
          _
      $region12: #{tpu_custom_call.1} parent=5 // pred_fallthru
        _
      %p166 = scmp.lt.s32.totalorder %s14, 2
      // Predicated region
      $region21: #{tpu_custom_call.1} parent=5 // pred_check
        %p167 = pneg %p166
      $region22: #{tpu_custom_call.1} parent=5 // pred_check_branch
        %169 = sbr.rel (%p167) target = $region24
      $region23: #{tpu_custom_call.1} parent=5 // pred_region
        // Predicated region
        $region25: #{tpu_custom_call.1} parent=23 // pred_check
          %p170 = pneg %p34
        $region26: #{tpu_custom_call.1} parent=23 // pred_check_branch
          %172 = sbr.rel (%p170) target = $region28
        $region27: #{tpu_custom_call.1} parent=23 // pred_region
          %s173 = sand.u32 %s24, 1
          %s174 = scalar_lea.sflag [#allocation3], %s173
          %s175 = sand.u32 %s24, 1
          %s176 = smul.addr %s175, 16
          %s177 = scalar_lea.vmem [#allocation2], %s176
          %179 = vsyncadd %s174, 0
          %s180 = smul.addr %s14, 2
          %s181 = smul.addr %s180, 8
          %s182 = scalar_lea.hbm %s0, %s181
          %s183 = sshll.u32 %s182, 4
          %s184 = int_to_ptr.hbm [resolvable:$true] %s183
          %s185 = sshll.u32 %s177, 4
          %s186 = int_to_ptr.vmem [resolvable:$true] %s185
          %191 = dma.hbm_to_vmem [thread:$0]  %s184, 256, %s186, %s174, 128, 128, 8
        $region28: #{tpu_custom_call.1} parent=23 // pred_fallthru
          _
        // Predicated region
        $region29: #{tpu_custom_call.1} parent=23 // pred_check
          %p192 = pneg %p60
        $region30: #{tpu_custom_call.1} parent=23 // pred_check_branch
          %194 = sbr.rel (%p192) target = $region32
        $region31: #{tpu_custom_call.1} parent=23 // pred_region
          %p195 = scmp.lt.s32.totalorder %s14, 1
          %s196 = scalar_select %p195, %s14, 1
          %s197 = smul.addr %s196, 4
          %s198 = smul.addr %s197, 8
          %s199 = scalar_lea.vmem %s1, %s198
        $region32: #{tpu_custom_call.1} parent=23 // pred_fallthru
          _
      $region24: #{tpu_custom_call.1} parent=5 // pred_fallthru
        _
      %p200 = scmp.le.s32.totalorder 1, %s14
      %p201 = scmp.lt.s32.totalorder %s14, 3
      %p202 = pnand %p200, %p201
      %p203 = pneg %p202
      // Predicated region
      $region33: #{tpu_custom_call.1} parent=5 // pred_check
        _
      $region34: #{tpu_custom_call.1} parent=5 // pred_check_branch
        %205 = sbr.rel (%p202) target = $region36
      $region35: #{tpu_custom_call.1} parent=5 // pred_region
        %s206 = ssub.s32 %s14, 1
        %s207 = sand.u32 %s27, 1
        %s208 = scalar_lea.sflag [#allocation3], %s207
        %s209 = sand.u32 %s27, 1
        %s210 = smul.addr %s209, 16
        %s211 = scalar_lea.vmem [#allocation2], %s210
        // Predicated region
        $region37: #{tpu_custom_call.1} parent=35 // pred_check
          %p212 = pneg %p40
        $region38: #{tpu_custom_call.1} parent=35 // pred_check_branch
          %214 = sbr.rel (%p212) target = $region40
        $region39: #{tpu_custom_call.1} parent=35 // pred_region
          %216 = dma.done %s208, 256
        $region40: #{tpu_custom_call.1} parent=35 // pred_fallthru
          _
        // Predicated region
        $region41: #{tpu_custom_call.1} parent=35 // pred_check
          %p217 = pneg %p108
        $region42: #{tpu_custom_call.1} parent=35 // pred_check_branch
          %219 = sbr.rel (%p217) target = $region44
        $region43: #{tpu_custom_call.1} parent=35 // pred_region
          %221 = dma.done [#allocation5], 48
        $region44: #{tpu_custom_call.1} parent=35 // pred_fallthru
          _
        %s222 = sand.u32 %s27, 1
        %s223 = scalar_lea.sflag [#allocation3], %s222
        %s224 = sand.u32 %s27, 1
        %s225 = smul.addr %s224, 16
        %s226 = scalar_lea.vmem [#allocation2], %s225
        %p227 = pneg %p40
        %p228 = pneg %p37
        %p229 = scmp.lt.s32.totalorder %s19, 1
        %s230 = scalar_select %p229, %s19, 1
        %s231 = smul.addr %s230, 4
        %s232 = smul.addr %s231, 8
        %s233 = scalar_lea.vmem %s1, %s232
        %p234 = pneg %p66
        %p235 = pneg %p63
        %p236 = pneg %p87
        %p237 = pneg %p84
        %p238 = pneg %p108
        %p239 = pneg %p105
        %p240 = pneg %p134
        %p241 = pneg %p131
        %p242 = scmp.lt.s32.totalorder %s19, 1
        %s243 = scalar_select %p242, %s19, 1
        %s244 = smul.addr %s243, 4
        %s245 = smul.addr %s244, 8
        %s246 = scalar_lea.vmem %s4, %s245
        %p247 = scmp.lt.s32.totalorder %s19, 1
        %s248 = scalar_select %p247, %s19, 1
        %s249 = smul.addr %s248, 4
        %s250 = smul.addr %s249, 8
        %s251 = scalar_lea.vmem %s1, %s250
        %p252 = scmp.lt.s32.totalorder %s19, 1
        %s253 = scalar_select %p252, %s19, 1
        %s254 = smul.addr %s253, 4
        %s255 = smul.addr %s254, 8
        %s256 = scalar_lea.vmem %s4, %s255
        %v257 = vld [vmem:[%s211] sm:$0xff]
        %v258 = vld [vmem:[%s211 + $0x8] sm:$0xff]
        %v259 = vld [vmem:[%s2] sm:$0xff]
        %v260 = vld [vmem:[%s2 + $0x8] sm:$0xff]
        %v261 = vld [vmem:[%s2 + $0x10] sm:$0xff]
        %v262 = vld [vmem:[%s2 + $0x18] sm:$0xff]
        %v263 = vld [vmem:[#allocation4] sm:$0x1]
        %v265 = vperm.slane %v263, 0
        %vm267 = vcmask 261120
        %v269 = vsel %vm267, %v257, 0
        %v272 = vsel %vm267, %v258, 0
        %274 = vmatpush.msra.mxu0 0.0
        %275 = vmatpush.msra.mxu0 0.0
        %276 = vmatpush.msra.mxu0 0.0
        %277 = vmatpush.msra.mxu0 0.0
        %278 = vmatpush.msra.mxu0 0.0
        %279 = vmatpush.msra.mxu0 0.0
        %280 = vmatpush.msra.mxu0 0.0
        %281 = vmatpush.msra.mxu0 0.0
        %282 = vmatpush.msra.mxu0 0.0
        %283 = vmatpush.msra.mxu0 0.0
        %284 = vmatpush.msra.mxu0 0.0
        %285 = vmatpush.msra.mxu0 0.0
        %286 = vmatpush.msra.mxu0 %v262
        %287 = vmatpush.msra.mxu0 %v261
        %288 = vmatpush.msra.mxu0 %v260
        %289 = vmatpush.msra.mxu0 %v259
        %290 = vmatmul.f32.gmra.mxu0 %v269
        %v291 = vpop.f32.mrf.mxu0
        %v292 = vadd.f32 %v265, %v291
        %293 = vmatmul.f32.gmra.mxu0 %v272
        %v294 = vpop.f32.mrf.mxu0
        %v295 = vadd.f32 %v265, %v294
        %296 = vdwg.mxu0
        %s297 = scalar_lea.vmem %s2, 32
        %v298 = vld [vmem:[%s297] sm:$0xff]
        %v299 = vld [vmem:[%s297 + $0x8] sm:$0xff]
        %v300 = vld [vmem:[%s297 + $0x10] sm:$0xff]
        %v301 = vld [vmem:[%s297 + $0x18] sm:$0xff]
        %s302 = scalar_lea.vmem [#allocation4], 1
        %v303 = vld [vmem:[%s302] sm:$0x1]
        %v305 = vperm.slane %v303, 0
        %307 = vmatpush.msra.mxu0 0.0
        %308 = vmatpush.msra.mxu0 0.0
        %309 = vmatpush.msra.mxu0 0.0
        %310 = vmatpush.msra.mxu0 0.0
        %311 = vmatpush.msra.mxu0 0.0
        %312 = vmatpush.msra.mxu0 0.0
        %313 = vmatpush.msra.mxu0 0.0
        %314 = vmatpush.msra.mxu0 0.0
        %315 = vmatpush.msra.mxu0 0.0
        %316 = vmatpush.msra.mxu0 0.0
        %317 = vmatpush.msra.mxu0 0.0
        %318 = vmatpush.msra.mxu0 0.0
        %319 = vmatpush.msra.mxu0 %v301
        %320 = vmatpush.msra.mxu0 %v300
        %321 = vmatpush.msra.mxu0 %v299
        %322 = vmatpush.msra.mxu0 %v298
        %323 = vmatmul.f32.gmra.mxu0 %v269
        %v324 = vpop.f32.mrf.mxu0
        %v325 = vadd.f32 %v305, %v324
        %326 = vmatmul.f32.gmra.mxu0 %v272
        %v327 = vpop.f32.mrf.mxu0
        %v328 = vadd.f32 %v305, %v327
        %329 = vdwg.mxu0
        %s330 = scalar_lea.vmem %s2, 64
        %v331 = vld [vmem:[%s330] sm:$0xff]
        %v332 = vld [vmem:[%s330 + $0x8] sm:$0xff]
        %v333 = vld [vmem:[%s330 + $0x10] sm:$0xff]
        %v334 = vld [vmem:[%s330 + $0x18] sm:$0xff]
        %s335 = scalar_lea.vmem [#allocation4], 2
        %v336 = vld [vmem:[%s335] sm:$0x1]
        %v338 = vperm.slane %v336, 0
        %340 = vmatpush.msra.mxu0 0.0
        %341 = vmatpush.msra.mxu0 0.0
        %342 = vmatpush.msra.mxu0 0.0
        %343 = vmatpush.msra.mxu0 0.0
        %344 = vmatpush.msra.mxu0 0.0
        %345 = vmatpush.msra.mxu0 0.0
        %346 = vmatpush.msra.mxu0 0.0
        %347 = vmatpush.msra.mxu0 0.0
        %348 = vmatpush.msra.mxu0 0.0
        %349 = vmatpush.msra.mxu0 0.0
        %350 = vmatpush.msra.mxu0 0.0
        %351 = vmatpush.msra.mxu0 0.0
        %352 = vmatpush.msra.mxu0 %v334
        %353 = vmatpush.msra.mxu0 %v333
        %354 = vmatpush.msra.mxu0 %v332
        %355 = vmatpush.msra.mxu0 %v331
        %356 = vmatmul.f32.gmra.mxu0 %v269
        %v357 = vpop.f32.mrf.mxu0
        %v358 = vadd.f32 %v338, %v357
        %359 = vmatmul.f32.gmra.mxu0 %v272
        %v360 = vpop.f32.mrf.mxu0
        %v361 = vadd.f32 %v338, %v360
        %362 = vdwg.mxu0
        %v364 = vsel %vm267, %v292, 0
        %v367 = vsel %vm267, %v295, 0
        %v370 = vsel %vm267, %v325, 0
        %v373 = vsel %vm267, %v328, 0
        %375 = vmatpush.xpose.msra.mxu0 0.0
        %376 = vmatpush.xpose.msra.mxu0 0.0
        %377 = vmatpush.xpose.msra.mxu0 0.0
        %378 = vmatpush.xpose.msra.mxu0 0.0
        %379 = vmatpush.xpose.msra.mxu0 0.0
        %380 = vmatpush.xpose.msra.mxu0 0.0
        %381 = vmatpush.xpose.msra.mxu0 0.0
        %382 = vmatpush.xpose.msra.mxu0 0.0
        %383 = vmatpush.xpose.msra.mxu0 0.0
        %384 = vmatpush.xpose.msra.mxu0 0.0
        %385 = vmatpush.xpose.msra.mxu0 0.0
        %386 = vmatpush.xpose.msra.mxu0 0.0
        %387 = vmatpush.xpose.msra.mxu0 0.0
        %388 = vmatpush.xpose.msra.mxu0 0.0
        %389 = vmatpush.xpose.msra.mxu0 %v373
        %390 = vmatpush.xpose.msra.mxu0 %v370
        %391 = vmatmul.f32.gmra.mxu0 %v364
        %v392 = vpop.f32.mrf.mxu0
        %v393 = vadd.f32 0.0, %v392
        %394 = vmatmul.f32.gmra.mxu0 %v367
        %v395 = vpop.f32.mrf.mxu0
        %v396 = vadd.f32 0.0, %v395
        %397 = vdwg.mxu0
        %vm398 = vcmask 130048
        %v399 = vsel %vm398, %v393, -inf
        %400 = vmax.xlane.f32.xlu0 %v399
        %v401 = vpop.xlane.xlu0 %400
        %v402 = vsel %vm398, %v396, -inf
        %403 = vmax.xlane.f32.xlu0 %v402
        %v404 = vpop.xlane.xlu0 %403
        %v405 = vsub.f32 %v393, %v401
        %v406 = vsub.f32 %v396, %v404
        %v407 = vmul.f32 %v405, 1.442695
        %v408 = vpow.pop %v407
        %v409 = vmul.f32 %v406, 1.442695
        %v410 = vpow.pop %v409
        %v411 = vsel %vm398, %v408, 0.0
        %412 = vadd.xlane.f32.xlu0 %v411
        %v413 = vpop.xlane.xlu0 %412
        %v414 = vsel %vm398, %v410, 0.0
        %415 = vadd.xlane.f32.xlu0 %v414
        %v416 = vpop.xlane.xlu0 %415
        %v417 = vrcp.pop %v413
        %v418 = vrcp.pop %v416
        %v419 = vmul.f32 %v408, %v417
        %v420 = vmul.f32 %v410, %v418
        %v421 = vld [vmem:[%s251] sm:$0xff]
        %v422 = vld [vmem:[%s251 + $0x8] sm:$0xff]
        %v423 = vld [vmem:[%s251 + $0x10] sm:$0xff]
        %v424 = vld [vmem:[%s251 + $0x18] sm:$0xff]
        %425 = vxpose.xlu0.b32.start [1/16] %v358, 128
        %426 = vxpose.xlu0.b32.cont [2/16] %v361, 128
        %427 = vxpose.xlu0.b32.cont [3/16] 0.0, 128
        %428 = vxpose.xlu0.b32.cont [4/16] 0.0, 128
        %429 = vxpose.xlu0.b32.cont [5/16] 0.0, 128
        %430 = vxpose.xlu0.b32.cont [6/16] 0.0, 128
        %431 = vxpose.xlu0.b32.cont [7/16] 0.0, 128
        %432 = vxpose.xlu0.b32.cont [8/16] 0.0, 128
        %433 = vxpose.xlu0.b32.cont [9/16] 0.0, 128
        %434 = vxpose.xlu0.b32.cont [10/16] 0.0, 128
        %435 = vxpose.xlu0.b32.cont [11/16] 0.0, 128
        %436 = vxpose.xlu0.b32.cont [12/16] 0.0, 128
        %437 = vxpose.xlu0.b32.cont [13/16] 0.0, 128
        %438 = vxpose.xlu0.b32.cont [14/16] 0.0, 128
        %439 = vxpose.xlu0.b32.cont [15/16] 0.0, 128
        %440 = vxpose.xlu0.b32.end [16/16] 0.0, 128
        %v441 = vpop.trf.xlu0
        %v442 = vpop.trf.xlu0
        %v443 = vpop.trf.xlu0
        %v444 = vpop.trf.xlu0
        %v445 = vpop.trf.xlu0
        %v446 = vpop.trf.xlu0
        %v447 = vpop.trf.xlu0
        %v448 = vpop.trf.xlu0
        %v449 = vpop.trf.xlu0
        %v450 = vpop.trf.xlu0
        %v451 = vpop.trf.xlu0
        %v452 = vpop.trf.xlu0
        %v453 = vpop.trf.xlu0
        %v454 = vpop.trf.xlu0
        %v455 = vpop.trf.xlu0
        %v456 = vpop.trf.xlu0
        %v458 = vsel %vm398, %v441, 0
        %v461 = vsel %vm398, %v442, 0
        %v464 = vsel %vm398, %v443, 0
        %v467 = vsel %vm398, %v444, 0
        %v470 = vsel %vm398, %v419, 0
        %v473 = vsel %vm398, %v420, 0
        %475 = vmatpush.xpose.msra.mxu0 0.0
        %476 = vmatpush.xpose.msra.mxu0 0.0
        %477 = vmatpush.xpose.msra.mxu0 0.0
        %478 = vmatpush.xpose.msra.mxu0 0.0
        %479 = vmatpush.xpose.msra.mxu0 0.0
        %480 = vmatpush.xpose.msra.mxu0 0.0
        %481 = vmatpush.xpose.msra.mxu0 0.0
        %482 = vmatpush.xpose.msra.mxu0 0.0
        %483 = vmatpush.xpose.msra.mxu0 0.0
        %484 = vmatpush.xpose.msra.mxu0 0.0
        %485 = vmatpush.xpose.msra.mxu0 0.0
        %486 = vmatpush.xpose.msra.mxu0 0.0
        %487 = vmatpush.xpose.msra.mxu0 0.0
        %488 = vmatpush.xpose.msra.mxu0 0.0
        %489 = vmatpush.xpose.msra.mxu0 %v473
        %490 = vmatpush.xpose.msra.mxu0 %v470
        %491 = vmatmul.f32.gmra.mxu0 %v458
        %v492 = vpop.f32.mrf.mxu0
        %v493 = vadd.f32 %v421, %v492
        %494 = vmatmul.f32.gmra.mxu0 %v461
        %v495 = vpop.f32.mrf.mxu0
        %v496 = vadd.f32 %v422, %v495
        %497 = vmatmul.f32.gmra.mxu0 %v464
        %v498 = vpop.f32.mrf.mxu0
        %v499 = vadd.f32 %v423, %v498
        %500 = vmatmul.f32.gmra.mxu0 %v467
        %v501 = vpop.f32.mrf.mxu0
        %v502 = vadd.f32 %v424, %v501
        %503 = vdwg.mxu0
        %504 = vst.msk [vmem:[%s256] sm:$0xff] %vm398, %v493
        %505 = vst.msk [vmem:[%s256 + $0x8] sm:$0xff] %vm398, %v496
        %506 = vst.msk [vmem:[%s256 + $0x10] sm:$0xff] %vm398, %v499
        %507 = vst.msk [vmem:[%s256 + $0x18] sm:$0xff] %vm398, %v502
        %p508 = scmp.lt.s32.totalorder %s19, 1
        %s509 = scalar_select %p508, %s19, 1
        %s510 = smul.addr %s509, 4
        %s511 = smul.addr %s510, 8
        %s512 = scalar_lea.vmem %s4, %s511
        // Predicated region
        $region45: #{tpu_custom_call.1} parent=35 // pred_check
          %p513 = pneg %p131
        $region46: #{tpu_custom_call.1} parent=35 // pred_check_branch
          %515 = sbr.rel (%p513) target = $region48
        $region47: #{tpu_custom_call.1} parent=35 // pred_region
          _
        $region48: #{tpu_custom_call.1} parent=35 // pred_fallthru
          _
      $region36: #{tpu_custom_call.1} parent=5 // pred_fallthru
        _
      %p516 = scmp.le.s32.totalorder 2, %s14
      // Predicated region
      $region49: #{tpu_custom_call.1} parent=5 // pred_check
        %p517 = pneg %p516
      $region50: #{tpu_custom_call.1} parent=5 // pred_check_branch
        %519 = sbr.rel (%p517) target = $region52
      $region51: #{tpu_custom_call.1} parent=5 // pred_region
        %s520 = ssub.s32 %s14, 2
        // Predicated region
        $region53: #{tpu_custom_call.1} parent=51 // pred_check
          %p521 = pneg %p137
        $region54: #{tpu_custom_call.1} parent=51 // pred_check_branch
          %523 = sbr.rel (%p521) target = $region56
        $region55: #{tpu_custom_call.1} parent=51 // pred_region
          %p524 = scmp.lt.s32.totalorder %s20, 1
          %s525 = scalar_select %p524, %s20, 1
          %s526 = smul.addr %s525, 4
          %s527 = smul.addr %s526, 8
          %s528 = scalar_lea.vmem %s4, %s527
        $region56: #{tpu_custom_call.1} parent=51 // pred_fallthru
          _
      $region52: #{tpu_custom_call.1} parent=5 // pred_fallthru
        _
    $region6: #{tpu_custom_call.1} parent=1 // loop_footer
      %s18 = sadd.s32 1, %s14
    $region7: #{tpu_custom_call.1} parent=1 // loop_footer_branch
      %13 = sbr.rel target = $region3
    $region8: #{tpu_custom_call.1} parent=1 // loop_exit
      _
    %529 = vsyncpa [#allocation3], 1
    %s530 = scalar_lea.sflag [#allocation3], 1
    %531 = vsyncpa %s530, 1
    %532 = vsyncpa [#allocation5], 1

</llo_original>
